<compile_context>
chip_gen: v7x
topology: tpu7x:2x2x1
jax: 0.10.0
libtpu: 0.0.40
codegen_flags: <defaults>
</compile_context>

<pallas_src>
import jax
import jax.numpy as jnp
from jax.experimental import pallas as pl
from jax.experimental.pallas import tpu as pltpu


def _net_kernel(x_ref, w1_ref, b1_ref, w2_ref, b2_ref, w3_ref, b3_ref, o_ref):
    # x_ref: (TB, n_features) f32 tile of the batch.
    x = x_ref[...]
    h1 = jnp.tanh(
        jnp.dot(x, w1_ref[...], preferred_element_type=jnp.float32) + b1_ref[...]
    )
    h2 = jnp.tanh(
        jnp.dot(h1, w2_ref[...], preferred_element_type=jnp.float32) + b2_ref[...]
    )
    # fc3 (16 -> 1): VPU broadcast-multiply + XLU lane reduce instead of an MXU
    # matmul whose result would occupy 1 of 128 output lanes.
    z3 = jnp.sum(h2 * w3_ref[...], axis=-1) + b3_ref[0]          # (TB,)
    # Lane-dense store: one (1, TB) row instead of TB/8 masked 1-lane stores.
    o_ref[...] = jax.nn.sigmoid(z3).reshape(1, -1)


def net_forward(x, params):
    """x: [B, n_features] f32. params: dict of (w1,b1,w2,b2,w3,b3).

    Weights stored PyTorch-style as (out_features, in_features); fc1/fc2 are
    transposed here so the kernel does plain row-major matmuls; fc3's single row
    is kept as (1, 16) for the VPU reduce.
    """
    B, nf = x.shape
    w1 = params["w1"].T                 # (n_features, 38)
    w2 = params["w2"].T                 # (38, 16)
    w3 = params["w3"].reshape(1, 16)    # (1, 16) row, broadcast against h2
    b1 = params["b1"].reshape(1, -1)    # (1, 38)
    b2 = params["b2"].reshape(1, -1)    # (1, 16)
    b3 = params["b3"].reshape(-1)       # (1,) scalar bias -> SMEM

    # Batch-tile size: big enough to overlap DMA with compute, small enough to
    # keep double-buffered x tiles well under the smallest scoped-VMEM budget
    # (v7x: 64 MiB physical / 32 MiB default scoped).
    tb_max = 1024
    bytes_per_row = nf * 4
    while tb_max > 256 and 2 * tb_max * bytes_per_row > 8 * 1024 * 1024:
        tb_max //= 2
    if B <= tb_max:
        TB = B                          # single full-extent tile (any B allowed)
    else:
        TB = tb_max                     # multiple of 8 and 128 -> edge blocks OK
    num_tiles = pl.cdiv(B, TB)

    # Weights/biases: full-array blocks, constant index map -> VMEM-resident.
    def resident(a):
        return pl.BlockSpec(a.shape, lambda i: (0, 0))

    flops = 2 * B * (nf * 38 + 38 * 16 + 16)
    transcendentals = B * (38 + 16 + 1)
    bytes_accessed = (
        B * nf * 4 + B * 4
        + 4 * (nf * 38 + 38 + 38 * 16 + 16 + 16 + 1)
    )

    out = pl.pallas_call(
        _net_kernel,
        out_shape=jax.ShapeDtypeStruct((1, B), jnp.float32),
        grid=(num_tiles,),
        in_specs=[
            pl.BlockSpec((TB, nf), lambda i: (i, 0)),          # x: streamed tiles
            resident(w1),
            resident(b1),
            resident(w2),
            resident(b2),
            resident(w3),
            pl.BlockSpec(memory_space=pltpu.MemorySpace.SMEM),  # b3 scalar
        ],
        out_specs=pl.BlockSpec((1, TB), lambda i: (0, i)),      # lane-dense rows
        compiler_params=pltpu.CompilerParams(
            dimension_semantics=("parallel",),
            vmem_limit_bytes=32 * 1024 * 1024,
        ),
        cost_estimate=pl.CostEstimate(
            flops=flops,
            transcendentals=transcendentals,
            bytes_accessed=bytes_accessed,
        ),
    )(x, w1, b1, w2, b2, w3, b3)

    return out.reshape(B, 1)


def init_params(key, n_features):
    """Deterministic PyTorch-like init: U(-1/sqrt(fan_in), 1/sqrt(fan_in))."""
    def linear(key, fan_in, fan_out):
        kw, kb = jax.random.split(key)
        bound = 1.0 / jnp.sqrt(jnp.float32(fan_in))
        w = jax.random.uniform(kw, (fan_out, fan_in), jnp.float32, -bound, bound)
        b = jax.random.uniform(kb, (fan_out,), jnp.float32, -bound, bound)
        return w, b

    k1, k2, k3 = jax.random.split(key, 3)
    w1, b1 = linear(k1, n_features, 38)
    w2, b2 = linear(k2, 38, 16)
    w3, b3 = linear(k3, 16, 1)
    return {"w1": w1, "b1": b1, "w2": w2, "b2": b2, "w3": w3, "b3": b3}


def _reference(x, p):
    h1 = jnp.tanh(x @ p["w1"].T + p["b1"])
    h2 = jnp.tanh(h1 @ p["w2"].T + p["b2"])
    return jax.nn.sigmoid(h2 @ p["w3"].T + p["b3"])


if __name__ == "__main__":
    key = jax.random.PRNGKey(0)
    k_param, k_x, k_x2 = jax.random.split(key, 3)

    batch = 8
    n_features = 32  # small, consistent with the module's generic n_features

    params = init_params(k_param, n_features)

    # Small single-tile case (mirrors the module's print of the forward output).
    x = jax.random.normal(k_x, (batch, n_features), jnp.float32)
    out = jax.block_until_ready(net_forward(x, params))
    print(f"forward net output: {out}")
    ref = _reference(x, params)
    assert out.shape == (batch, 1)
    assert jnp.allclose(out, ref, atol=1e-5, rtol=1e-5), "mismatch vs reference (small)"

    # Multi-tile case to exercise the pipelined batch grid (2 tiles of 1024).
    big_batch = 2048
    x_big = jax.random.normal(k_x2, (big_batch, n_features), jnp.float32)
    out_big = jax.block_until_ready(net_forward(x_big, params))
    ref_big = _reference(x_big, params)
    assert out_big.shape == (big_batch, 1)
    assert jnp.allclose(out_big, ref_big, atol=1e-5, rtol=1e-5), "mismatch vs reference (big)"

    print("KERNEL_OK")
</pallas_src>

<mosaic_0001>
module attributes {stable_mosaic.version = 11 : i64} {
  func.func @_net_kernel(%arg0: i32, %arg1: memref<8x32xf32, #tpu.memory_space<vmem>>, %arg2: memref<32x38xf32, #tpu.memory_space<vmem>>, %arg3: memref<1x38xf32, #tpu.memory_space<vmem>>, %arg4: memref<38x16xf32, #tpu.memory_space<vmem>>, %arg5: memref<1x16xf32, #tpu.memory_space<vmem>>, %arg6: memref<1x16xf32, #tpu.memory_space<vmem>>, %arg7: memref<1xf32, #tpu.memory_space<smem>>, %arg8: memref<1x8xf32, #tpu.memory_space<vmem>>) attributes {dimension_semantics = [#tpu.dimension_semantics<parallel>], iteration_bounds = array<i64: 1>, scalar_prefetch = 0 : i64, scratch_operands = 0 : i64, tpu.core_type = #tpu.core_type<tc>, window_params = [{transform_indices = @transform_0, window_bounds = array<i64: 8, 32>}, {pipeline_mode = #tpu.pipeline_mode<synchronous>, transform_indices = @transform_1, window_bounds = array<i64: 32, 38>}, {pipeline_mode = #tpu.pipeline_mode<synchronous>, transform_indices = @transform_2, window_bounds = array<i64: 1, 38>}, {pipeline_mode = #tpu.pipeline_mode<synchronous>, transform_indices = @transform_3, window_bounds = array<i64: 38, 16>}, {pipeline_mode = #tpu.pipeline_mode<synchronous>, transform_indices = @transform_4, window_bounds = array<i64: 1, 16>}, {pipeline_mode = #tpu.pipeline_mode<synchronous>, transform_indices = @transform_5, window_bounds = array<i64: 1, 16>}, {transform_indices = @transform_6, window_bounds = array<i64: 1>}, {transform_indices = @transform_7, window_bounds = array<i64: 1, 8>}]} {
    %c0 = arith.constant 0 : index
    %c0_0 = arith.constant 0 : index
    %0 = vector.load %arg1[%c0, %c0_0] : memref<8x32xf32, #tpu.memory_space<vmem>>, vector<8x32xf32>
    %c0_1 = arith.constant 0 : index
    %c0_2 = arith.constant 0 : index
    %1 = vector.load %arg2[%c0_1, %c0_2] : memref<32x38xf32, #tpu.memory_space<vmem>>, vector<32x38xf32>
    %cst = arith.constant dense<0.000000e+00> : vector<8x38xf32>
    %2 = tpu.matmul %0, %1, %cst {dimension_numbers = #tpu.dot_dimension_numbers<[1], [0], [0], [1], [0, 0, 1, 1], [], []>} : vector<8x32xf32>, vector<32x38xf32>, vector<8x38xf32> -> vector<8x38xf32>
    %c0_3 = arith.constant 0 : index
    %c0_4 = arith.constant 0 : index
    %3 = vector.load %arg3[%c0_3, %c0_4] : memref<1x38xf32, #tpu.memory_space<vmem>>, vector<1x38xf32>
    %4 = vector.broadcast %3 : vector<1x38xf32> to vector<8x38xf32>
    %5 = arith.addf %2, %4 : vector<8x38xf32>
    %6 = math.tanh %5 : vector<8x38xf32>
    %c0_5 = arith.constant 0 : index
    %c0_6 = arith.constant 0 : index
    %7 = vector.load %arg4[%c0_5, %c0_6] : memref<38x16xf32, #tpu.memory_space<vmem>>, vector<38x16xf32>
    %cst_7 = arith.constant dense<0.000000e+00> : vector<8x16xf32>
    %8 = tpu.matmul %6, %7, %cst_7 {dimension_numbers = #tpu.dot_dimension_numbers<[1], [0], [0], [1], [0, 0, 1, 1], [], []>} : vector<8x38xf32>, vector<38x16xf32>, vector<8x16xf32> -> vector<8x16xf32>
    %c0_8 = arith.constant 0 : index
    %c0_9 = arith.constant 0 : index
    %9 = vector.load %arg5[%c0_8, %c0_9] : memref<1x16xf32, #tpu.memory_space<vmem>>, vector<1x16xf32>
    %10 = vector.broadcast %9 : vector<1x16xf32> to vector<8x16xf32>
    %11 = arith.addf %8, %10 : vector<8x16xf32>
    %12 = math.tanh %11 : vector<8x16xf32>
    %c0_10 = arith.constant 0 : index
    %c0_11 = arith.constant 0 : index
    %13 = vector.load %arg6[%c0_10, %c0_11] : memref<1x16xf32, #tpu.memory_space<vmem>>, vector<1x16xf32>
    %14 = vector.broadcast %13 : vector<1x16xf32> to vector<8x16xf32>
    %15 = arith.mulf %12, %14 : vector<8x16xf32>
    %cst_12 = arith.constant dense<0.000000e+00> : vector<8xf32>
    %16 = vector.multi_reduction <add>, %15, %cst_12 [1] : vector<8x16xf32> to vector<8xf32>
    %c0_13 = arith.constant 0 : index
    %17 = memref.load %arg7[%c0_13] : memref<1xf32, #tpu.memory_space<smem>>
    %18 = vector.broadcast %17 : f32 to vector<8xf32>
    %19 = arith.addf %16, %18 : vector<8xf32>
    %20 = arith.negf %19 : vector<8xf32>
    %21 = math.exp %20 : vector<8xf32>
    %cst_14 = arith.constant 1.000000e+00 : f32
    %22 = vector.broadcast %cst_14 : f32 to vector<8xf32>
    %23 = arith.addf %22, %21 : vector<8xf32>
    %24 = arith.divf %22, %23 : vector<8xf32>
    %25 = vector.shape_cast %24 : vector<8xf32> to vector<1x8xf32>
    %c0_15 = arith.constant 0 : index
    %c0_16 = arith.constant 0 : index
    %26 = vector.load %arg8[%c0_15, %c0_16] : memref<1x8xf32, #tpu.memory_space<vmem>>, vector<1x8xf32>
    tpu.vector_store %arg8[%c0_15, %c0_16], %25 {strides = array<i32>} : memref<1x8xf32, #tpu.memory_space<vmem>>, vector<1x8xf32>,
    return
  }
  func.func @transform_0(%arg0: i32) -> (i32, i32) {
    %c0_i32 = arith.constant 0 : i32
    %c0_i32_0 = arith.constant 0 : i32
    return %arg0, %c0_i32 : i32, i32
  }
  func.func @transform_1(%arg0: i32) -> (i32, i32) {
    %c0_i32 = arith.constant 0 : i32
    %c0_i32_0 = arith.constant 0 : i32
    %c0_i32_1 = arith.constant 0 : i32
    return %c0_i32, %c0_i32_0 : i32, i32
  }
  func.func @transform_2(%arg0: i32) -> (i32, i32) {
    %c0_i32 = arith.constant 0 : i32
    %c0_i32_0 = arith.constant 0 : i32
    %c0_i32_1 = arith.constant 0 : i32
    return %c0_i32, %c0_i32_0 : i32, i32
  }
  func.func @transform_3(%arg0: i32) -> (i32, i32) {
    %c0_i32 = arith.constant 0 : i32
    %c0_i32_0 = arith.constant 0 : i32
    %c0_i32_1 = arith.constant 0 : i32
    return %c0_i32, %c0_i32_0 : i32, i32
  }
  func.func @transform_4(%arg0: i32) -> (i32, i32) {
    %c0_i32 = arith.constant 0 : i32
    %c0_i32_0 = arith.constant 0 : i32
    %c0_i32_1 = arith.constant 0 : i32
    return %c0_i32, %c0_i32_0 : i32, i32
  }
  func.func @transform_5(%arg0: i32) -> (i32, i32) {
    %c0_i32 = arith.constant 0 : i32
    %c0_i32_0 = arith.constant 0 : i32
    %c0_i32_1 = arith.constant 0 : i32
    return %c0_i32, %c0_i32_0 : i32, i32
  }
  func.func @transform_6(%arg0: i32) -> i32 {
    %c0_i32 = arith.constant 0 : i32
    %c0_i32_0 = arith.constant 0 : i32
    return %c0_i32 : i32
  }
  func.func @transform_7(%arg0: i32) -> (i32, i32) {
    %c0_i32 = arith.constant 0 : i32
    %c0_i32_0 = arith.constant 0 : i32
    return %c0_i32, %arg0 : i32, i32
  }
}

</mosaic_0001>

<llo_original>
// kernel: tpu_custom_call.1
$region0: #{tpu_custom_call.1}
  #allocation0 [shape = 'u32[]', space=smem, size = 0x4, offset = 0x4, fixed_abs, tag = 'smem constant byte address 0x4 - core index']
  #allocation1 [shape = 'u32[144,128]{1,0:T(1,128)}', space=vmem, size = 0x12000, scoped, tag = 'internal scratch']
  #allocation2 [shape = 'f32[1]{0:T(128)S(6)}', space=smem, size = 0x200, scoped, tag = 'scoped memory for tpu_custom_call.1']
  %s0 = inlined_call_operand.vmem [shape: f32[8,32], index: 0, kind: input, shape index: {}]
  %s1 = inlined_call_operand.vmem [shape: f32[32,38], index: 1, kind: input, shape index: {}]
  %s2 = inlined_call_operand.vmem [shape: f32[1,38], index: 2, kind: input, shape index: {}]
  %s3 = inlined_call_operand.vmem [shape: f32[38,16], index: 3, kind: input, shape index: {}]
  %s4 = inlined_call_operand.vmem [shape: f32[1,16], index: 4, kind: input, shape index: {}]
  %s5 = inlined_call_operand.vmem [shape: f32[1,16], index: 5, kind: input, shape index: {}]
  %s6 = inlined_call_operand.<no memory space> [shape: f32[1], index: 6, kind: input, shape index: {}]
  %s7 = inlined_call_operand.hbm [shape: f32[1,8], index: 7, kind: output, shape index: {}]
  %s8 = sld [smem:[#allocation0]]
  $region38: #{tpu_custom_call.1} parent=0
    _
  %s10 = ssub.s32 1, %s8
  %s11 = scalar_select 0, %s10, %s8
  %12 = sst [smem:[#allocation2]] %s6
  $region1: #{tpu_custom_call.1} parent=0
    #allocation3 [shape = 'u8[512]{0}', space=vmem, size = 0x400, scoped, tag = 'output window, operand 0, single buffered']
    #allocation4 [shape = 's32[1]{0}', space=sflag, size = 0x4, scoped, tag = 'scoped memory for tpu_custom_call.1']
    %13 = vsyncpa [#allocation4], 0
    // Predicated region
    $region2: #{tpu_custom_call.1} parent=1 // pred_check
      _
    $region3: #{tpu_custom_call.1} parent=1 // pred_check_branch
      %15 = sbr.rel (0) target = $region5
    $region4: #{tpu_custom_call.1} parent=1 // pred_region
      _
    $region5: #{tpu_custom_call.1} parent=1 // pred_fallthru
      _
    // Predicated region
    $region6: #{tpu_custom_call.1} parent=1 // pred_check
      _
    $region7: #{tpu_custom_call.1} parent=1 // pred_check_branch
      %17 = sbr.rel (0) target = $region9
    $region8: #{tpu_custom_call.1} parent=1 // pred_region
      _
    $region9: #{tpu_custom_call.1} parent=1 // pred_fallthru
      _
    // Predicated region
    $region10: #{tpu_custom_call.1} parent=1 // pred_check
      _
    $region11: #{tpu_custom_call.1} parent=1 // pred_check_branch
      %19 = sbr.rel (0) target = $region13
    $region12: #{tpu_custom_call.1} parent=1 // pred_region
      _
    $region13: #{tpu_custom_call.1} parent=1 // pred_fallthru
      _
    // Predicated region
    $region14: #{tpu_custom_call.1} parent=1 // pred_check
      _
    $region15: #{tpu_custom_call.1} parent=1 // pred_check_branch
      %21 = sbr.rel (0) target = $region17
    $region16: #{tpu_custom_call.1} parent=1 // pred_region
      _
    $region17: #{tpu_custom_call.1} parent=1 // pred_fallthru
      _
    // Predicated region
    $region18: #{tpu_custom_call.1} parent=1 // pred_check
      _
    $region19: #{tpu_custom_call.1} parent=1 // pred_check_branch
      %23 = sbr.rel (0) target = $region21
    $region20: #{tpu_custom_call.1} parent=1 // pred_region
      _
    $region21: #{tpu_custom_call.1} parent=1 // pred_fallthru
      _
    // Predicated region
    $region22: #{tpu_custom_call.1} parent=1 // pred_check
      _
    $region23: #{tpu_custom_call.1} parent=1 // pred_check_branch
      %25 = sbr.rel (0) target = $region25
    $region24: #{tpu_custom_call.1} parent=1 // pred_region
      _
    $region25: #{tpu_custom_call.1} parent=1 // pred_fallthru
      _
    // Predicated region
    $region26: #{tpu_custom_call.1} parent=1 // pred_check
      _
    $region27: #{tpu_custom_call.1} parent=1 // pred_check_branch
      %27 = sbr.rel (0) target = $region29
    $region28: #{tpu_custom_call.1} parent=1 // pred_region
      _
    $region29: #{tpu_custom_call.1} parent=1 // pred_fallthru
      _
    %v28 = vld [vmem:[%s0] sm:$0xff]
    %v29 = vld [vmem:[%s1] sm:$0xff]
    %v30 = vld [vmem:[%s1 + $0x8] sm:$0xff]
    %v31 = vld [vmem:[%s1 + $0x10] sm:$0xff]
    %v32 = vld [vmem:[%s1 + $0x18] sm:$0xff]
    %v33 = vld [vmem:[%s2] sm:$0x1]
    %v35 = vlaneseq
    %v36 = vshrl.u32 %v35, 7
    %v37 = vsub.s32 0, %v36
    %v38 = vrot.slane %v33, %v37
    %vm40 = vcmask 261120
    %v42 = vsel %vm40, %v28, 0
    %44 = vmatprep.subr.mxu0 0.0
    %45 = vmatpush1.msra.mxu0 %v29
    %46 = vmatprep.subr.mxu0 0.0
    %47 = vmatpush1.msra.mxu0 %v30
    %48 = vmatprep.subr.mxu0 0.0
    %49 = vmatpush1.msra.mxu0 %v31
    %50 = vmatprep.subr.mxu0 0.0
    %51 = vmatpush1.msra.mxu0 %v32
    %52 = vmatprep.subr.mxu0 0.0
    %53 = vmatpush1.msra.mxu0 0.0
    %54 = vmatprep.subr.mxu0 0.0
    %55 = vmatpush1.msra.mxu0 0.0
    %56 = vmatprep.subr.mxu0 0.0
    %57 = vmatpush1.msra.mxu0 0.0
    %58 = vmatprep.subr.mxu0 0.0
    %59 = vmatpush1.msra.mxu0 0.0
    %60 = vmatprep.subr.mxu0 0.0
    %61 = vmatpush1.msra.mxu0 0.0
    %62 = vmatprep.subr.mxu0 0.0
    %63 = vmatpush1.msra.mxu0 0.0
    %64 = vmatprep.subr.mxu0 0.0
    %65 = vmatpush1.msra.mxu0 0.0
    %66 = vmatprep.subr.mxu0 0.0
    %67 = vmatpush1.msra.mxu0 0.0
    %68 = vmatprep.subr.mxu0 0.0
    %69 = vmatpush1.msra.mxu0 0.0
    %70 = vmatprep.subr.mxu0 0.0
    %71 = vmatpush1.msra.mxu0 0.0
    %72 = vmatprep.subr.mxu0 0.0
    %73 = vmatpush1.msra.mxu0 0.0
    %74 = vmatprep.subr.mxu0 0.0
    %75 = vmatpush1.msra.mxu0 0.0
    %76 = vmatprep.subr.mxu0 0.0
    %77 = vmatpush1.msra.mxu0 0.0
    %78 = vmatprep.subr.mxu0 0.0
    %79 = vmatpush1.msra.mxu0 0.0
    %80 = vmatprep.subr.mxu0 0.0
    %81 = vmatpush1.msra.mxu0 0.0
    %82 = vmatprep.subr.mxu0 0.0
    %83 = vmatpush1.msra.mxu0 0.0
    %84 = vmatprep.subr.mxu0 0.0
    %85 = vmatpush1.msra.mxu0 0.0
    %86 = vmatprep.subr.mxu0 0.0
    %87 = vmatpush1.msra.mxu0 0.0
    %88 = vmatprep.subr.mxu0 0.0
    %89 = vmatpush1.msra.mxu0 0.0
    %90 = vmatprep.subr.mxu0 0.0
    %91 = vmatpush1.msra.mxu0 0.0
    %92 = vmatprep.subr.mxu0 0.0
    %93 = vmatpush1.msra.mxu0 0.0
    %94 = vmatprep.subr.mxu0 0.0
    %95 = vmatpush1.msra.mxu0 0.0
    %96 = vmatprep.subr.mxu0 0.0
    %97 = vmatpush1.msra.mxu0 0.0
    %98 = vmatprep.subr.mxu0 0.0
    %99 = vmatpush1.msra.mxu0 0.0
    %100 = vmatprep.subr.mxu0 0.0
    %101 = vmatpush1.msra.mxu0 0.0
    %102 = vmatprep.subr.mxu0 0.0
    %103 = vmatpush1.msra.mxu0 0.0
    %104 = vmatprep.subr.mxu0 0.0
    %105 = vmatpush1.msra.mxu0 0.0
    %106 = vmatprep.subr.mxu0 0.0
    %107 = vmatpush1.msra.mxu0 0.0
    %108 = vmatprep.mubr.f32.mxu0 0.0
    %109 = vmatmul.mubr.f32.gmra.mrb[0].mxu0 %v42
    %v110 = vpop.f32.mrb[0].mxu0
    %v111 = vadd.f32 %v38, %v110
    %v112 = vpop.f32.mrb[0].mxu0
    %113 = vdwg.mxu0
    %v114 = vtanh.pop %v111
    %v115 = vld [vmem:[%s3] sm:$0xff]
    %v116 = vld [vmem:[%s3 + $0x8] sm:$0xff]
    %v117 = vld [vmem:[%s3 + $0x10] sm:$0xff]
    %v118 = vld [vmem:[%s3 + $0x18] sm:$0xff]
    %v119 = vld [vmem:[%s3 + $0x20] sm:$0x3f]
    %v120 = vld [vmem:[%s4] sm:$0x1]
    %v122 = vlaneseq
    %v123 = vshrl.u32 %v122, 7
    %v124 = vsub.s32 0, %v123
    %v125 = vrot.slane %v120, %v124
    %vm127 = vcmask 310272
    %v129 = vsel %vm127, %v114, 0
    %vm131 = vcmask 1045504
    %v133 = vsel %vm131, %v119, 0
    %135 = vmatprep.subr.mxu0 0.0
    %136 = vmatpush1.msra.mxu0 %v115
    %137 = vmatprep.subr.mxu0 0.0
    %138 = vmatpush1.msra.mxu0 %v116
    %139 = vmatprep.subr.mxu0 0.0
    %140 = vmatpush1.msra.mxu0 %v117
    %141 = vmatprep.subr.mxu0 0.0
    %142 = vmatpush1.msra.mxu0 %v118
    %143 = vmatprep.subr.mxu0 0.0
    %144 = vmatpush1.msra.mxu0 %v133
    %145 = vmatprep.subr.mxu0 0.0
    %146 = vmatpush1.msra.mxu0 0.0
    %147 = vmatprep.subr.mxu0 0.0
    %148 = vmatpush1.msra.mxu0 0.0
    %149 = vmatprep.subr.mxu0 0.0
    %150 = vmatpush1.msra.mxu0 0.0
    %151 = vmatprep.subr.mxu0 0.0
    %152 = vmatpush1.msra.mxu0 0.0
    %153 = vmatprep.subr.mxu0 0.0
    %154 = vmatpush1.msra.mxu0 0.0
    %155 = vmatprep.subr.mxu0 0.0
    %156 = vmatpush1.msra.mxu0 0.0
    %157 = vmatprep.subr.mxu0 0.0
    %158 = vmatpush1.msra.mxu0 0.0
    %159 = vmatprep.subr.mxu0 0.0
    %160 = vmatpush1.msra.mxu0 0.0
    %161 = vmatprep.subr.mxu0 0.0
    %162 = vmatpush1.msra.mxu0 0.0
    %163 = vmatprep.subr.mxu0 0.0
    %164 = vmatpush1.msra.mxu0 0.0
    %165 = vmatprep.subr.mxu0 0.0
    %166 = vmatpush1.msra.mxu0 0.0
    %167 = vmatprep.subr.mxu0 0.0
    %168 = vmatpush1.msra.mxu0 0.0
    %169 = vmatprep.subr.mxu0 0.0
    %170 = vmatpush1.msra.mxu0 0.0
    %171 = vmatprep.subr.mxu0 0.0
    %172 = vmatpush1.msra.mxu0 0.0
    %173 = vmatprep.subr.mxu0 0.0
    %174 = vmatpush1.msra.mxu0 0.0
    %175 = vmatprep.subr.mxu0 0.0
    %176 = vmatpush1.msra.mxu0 0.0
    %177 = vmatprep.subr.mxu0 0.0
    %178 = vmatpush1.msra.mxu0 0.0
    %179 = vmatprep.subr.mxu0 0.0
    %180 = vmatpush1.msra.mxu0 0.0
    %181 = vmatprep.subr.mxu0 0.0
    %182 = vmatpush1.msra.mxu0 0.0
    %183 = vmatprep.subr.mxu0 0.0
    %184 = vmatpush1.msra.mxu0 0.0
    %185 = vmatprep.subr.mxu0 0.0
    %186 = vmatpush1.msra.mxu0 0.0
    %187 = vmatprep.subr.mxu0 0.0
    %188 = vmatpush1.msra.mxu0 0.0
    %189 = vmatprep.subr.mxu0 0.0
    %190 = vmatpush1.msra.mxu0 0.0
    %191 = vmatprep.subr.mxu0 0.0
    %192 = vmatpush1.msra.mxu0 0.0
    %193 = vmatprep.subr.mxu0 0.0
    %194 = vmatpush1.msra.mxu0 0.0
    %195 = vmatprep.subr.mxu0 0.0
    %196 = vmatpush1.msra.mxu0 0.0
    %197 = vmatprep.subr.mxu0 0.0
    %198 = vmatpush1.msra.mxu0 0.0
    %199 = vmatprep.mubr.f32.mxu0 0.0
    %200 = vmatmul.mubr.f32.gmra.mrb[0].mxu0 %v129
    %v201 = vpop.f32.mrb[0].mxu0
    %v202 = vadd.f32 %v125, %v201
    %v203 = vpop.f32.mrb[0].mxu0
    %204 = vdwg.mxu0
    %v205 = vtanh.pop %v202
    %v206 = vld [vmem:[%s5] sm:$0x1]
    %v208 = vlaneseq
    %v209 = vshrl.u32 %v208, 7
    %v210 = vsub.s32 0, %v209
    %v211 = vrot.slane %v206, %v210
    %v213 = vmul.f32 %v205, %v211
    %vm214 = vcmask 130048
    %v215 = vsel %vm214, %v213, 0.0
    %216 = vadd.xlane.f32.xlu0 %v215
    %v217 = vpop.xlane.xlu0 %216
    %s218 = sld [smem:[#allocation2]]
    %v219 = vstv %s218
    %v220 = vadd.f32 %v217, %v219
    %v221 = vxor.u32 %v220, 2147483648
    %v222 = vmul.f32 %v221, 1.442695
    %v223 = vpow.pop %v222
    %v224 = vadd.f32 %v223, 1.0
    %v225 = vrcp.pop %v224
    %v226 = vmul.f32 1.0, %v225
    %v228 = vlaneseq
    %v229 = vand.u32 %v228, 127
    %v230 = vlaneseq
    %v231 = vshrl.u32 %v230, 7
    %v232 = vsub.s32 %v229, %v231
    %v233 = vrot.slane %v226, %v232
    %vm235 = vcmask 57344
    %236 = vst.msk [vmem:[#allocation3] sm:$0x1] %vm235, %v233
    // Predicated region
    $region30: #{tpu_custom_call.1} parent=1 // pred_check
      _
    $region31: #{tpu_custom_call.1} parent=1 // pred_check_branch
      %238 = sbr.rel (0) target = $region33
    $region32: #{tpu_custom_call.1} parent=1 // pred_region
      %s240 = ssub.s32 16, 16
      %241 = vsyncadd [#allocation4], %s240
      %s243 = sshll.u32 [#allocation3], 4
      %s244 = int_to_ptr.vmem [resolvable:$true] %s243
      %246 = dma.vmem_to_hbm [thread:$0]  %s244, 16, %s7, [#allocation4]
    $region33: #{tpu_custom_call.1} parent=1 // pred_fallthru
      _
    // Predicated region
    $region34: #{tpu_custom_call.1} parent=1 // pred_check
      _
    $region35: #{tpu_custom_call.1} parent=1 // pred_check_branch
      %248 = sbr.rel (0) target = $region37
    $region36: #{tpu_custom_call.1} parent=1 // pred_region
      %249 = dma.done [#allocation4], 16
    $region37: #{tpu_custom_call.1} parent=1 // pred_fallthru
      _
    %250 = vsyncpa [#allocation4], 1

</llo_original>
